<compile_context>
chip_gen: v7x
topology: tpu7x:2x2x1
jax: 0.10.0
libtpu: 0.0.40
codegen_flags: <defaults>
</compile_context>

<pallas_src>
import functools

import jax
import jax.numpy as jnp
from jax.experimental import pallas as pl
from jax.experimental.pallas import tpu as pltpu


# --------------------------------------------------------------------------- #
# Kernel
# --------------------------------------------------------------------------- #
def _conv_rows_kernel(x_ref, t_ref, b_ref, o_ref, *, K, pad, act):
    # x_ref: (1, H, W*Cin)        one image; rows x (width*channels), Cin fastest
    # t_ref: (K*W*Cin, W*Cout)    row-Toeplitz weights (W boundary folded in)
    # b_ref: (1, W*Cout)          bias replicated along W
    # o_ref: (1, H, W*Cout)       lane-dense output block (W*Cout % 128 == 0)
    x = x_ref[0]                               # (H, W*Cin)
    H, WCin = x.shape

    # Build the contraction LHS: for each output row h we need input rows
    # h-pad .. h+pad (zero rows outside the image), concatenated along lanes.
    pieces = []
    for ky in range(K):
        s = ky - pad                           # row shift
        if s == 0:
            pieces.append(x)
        elif s > 0:
            zer = jnp.zeros((s, WCin), x.dtype)
            pieces.append(jnp.concatenate([x[s:], zer], axis=0))
        else:
            zer = jnp.zeros((-s, WCin), x.dtype)
            pieces.append(jnp.concatenate([zer, x[:s]], axis=0))
    lhs = jnp.concatenate(pieces, axis=1)      # (H, K*W*Cin)

    # Single MXU push: all taps, all output pixels of every row at once.
    acc = jnp.dot(lhs, t_ref[...], preferred_element_type=jnp.float32)
    acc = acc + b_ref[...]                     # (1, W*Cout) broadcast over rows
    if act:
        acc = jnp.maximum(acc, 0.0)
    o_ref[0] = acc.astype(o_ref.dtype)


# --------------------------------------------------------------------------- #
# Weight-side transform (tiny, pure JAX, cacheable per set of weights)
# --------------------------------------------------------------------------- #
def _build_row_toeplitz(w_oihw, W):
    """(Cout, Cin, K, K) conv weights -> (K*W*Cin, W*Cout) row-Toeplitz matrix.

    T[ky*W*Cin + w2*Cin + ci, w*Cout + co] = w[co, ci, ky, w2 - w + pad]
    when 0 <= w2 - w + pad < K, else 0 (this encodes the 'SAME' W-padding).
    """
    Cout, Cin, K, _ = w_oihw.shape
    pad = K // 2
    w_hwio = jnp.transpose(w_oihw, (2, 3, 1, 0))        # (ky, kx, ci, co)
    w2 = jnp.arange(W)[:, None]                         # source column
    w = jnp.arange(W)[None, :]                          # output column
    T = jnp.zeros((K, W, Cin, W, Cout), w_oihw.dtype)
    for kx in range(K):
        sel = (w2 == w + kx - pad).astype(w_oihw.dtype)  # (W, W) shifted diagonal
        T = T + jnp.einsum('pw,kio->kpiwo', sel, w_hwio[:, kx])
    return T.reshape(K * W * Cin, W * Cout)


# --------------------------------------------------------------------------- #
# Public forward (matches upsample.forward for model='edsr')
# --------------------------------------------------------------------------- #
def upsample_forward(x_nchw, params, *, shape, scale, bn=False, act=False):
    w_oihw, b = params["w"], params["b"]        # (Cout, Cin, K, K), (Cout,)
    N, Cin, H, W = x_nchw.shape
    Cout, _, K, _ = w_oihw.shape
    pad = K // 2
    WC_in, WC_out = W * Cin, W * Cout

    # Weight-side transforms (small; in a real model these are cached).
    T2 = _build_row_toeplitz(w_oihw, W)                     # (K*W*Cin, W*Cout)
    b_row = jnp.tile(b, (W,)).reshape(1, WC_out)            # (1, W*Cout)

    # Layout only: NCHW -> (N, H, W*Cin).  No jnp.pad of the activations.
    x_rows = jnp.transpose(x_nchw, (0, 2, 3, 1)).reshape(N, H, WC_in)

    # ReLU commutes with PixelShuffle (pure permutation) -> fuse unless BN
    # sits in between.
    fuse_relu = act and (not bn)
    kern = functools.partial(_conv_rows_kernel, K=K, pad=pad, act=fuse_relu)

    y_rows = pl.pallas_call(
        kern,
        out_shape=jax.ShapeDtypeStruct((N, H, WC_out), x_nchw.dtype),
        grid_spec=pltpu.PrefetchScalarGridSpec(
            num_scalar_prefetch=0,
            grid=(N,),                                     # parallel over batch
            in_specs=[
                pl.BlockSpec((1, H, WC_in), lambda n: (n, 0, 0)),
                pl.BlockSpec((K * W * Cin, WC_out), lambda n: (0, 0)),
                pl.BlockSpec((1, WC_out), lambda n: (0, 0)),
            ],
            out_specs=pl.BlockSpec((1, H, WC_out), lambda n: (n, 0, 0)),
        ),
        compiler_params=pltpu.CompilerParams(
            dimension_semantics=("parallel",),
            vmem_limit_bytes=32 * 1024 * 1024),
    )(x_rows, T2, b_row)
    # TODO(synk): for large spatial sizes add halo-based H tiling (grid=(N, H//tH))
    # so the per-block VMEM footprint stays bounded and v7x gets more parallel steps.

    # PixelShuffle + NHWC->NCHW: a single XLA transpose of the lane-dense output.
    # TODO(synk): fully fusing this permuted store into the kernel would need
    # strided (r-wide) stores, which defeats the lane-dense output — left in JAX.
    y = y_rows.reshape(N, H, W, shape, scale, scale)        # (N,H,W,c,i,j)
    y = jnp.transpose(y, (0, 3, 1, 4, 2, 5))                # (N,c,H,i,W,j)
    out = y.reshape(N, shape, H * scale, W * scale)

    if bn:
        # TODO(synk): training-mode BatchNorm2d (batch stats, gamma=1, beta=0) kept
        # in plain JAX; fusing per-channel sum/sum-of-squares into the conv kernel
        # would remove these extra HBM passes.
        mean = jnp.mean(out, axis=(0, 2, 3), keepdims=True)
        var = jnp.var(out, axis=(0, 2, 3), keepdims=True)
        out = (out - mean) / jnp.sqrt(var + 1e-5)
        if act:
            out = jnp.maximum(out, 0.0)
    return out


# --------------------------------------------------------------------------- #
# Pure-JAX reference (torch semantics: conv2d NCHW + PixelShuffle)
# --------------------------------------------------------------------------- #
def _reference_forward(x_nchw, params, *, shape, scale):
    w, b = params["w"], params["b"]
    y = jax.lax.conv_general_dilated(
        x_nchw, w, window_strides=(1, 1), padding="SAME",
        dimension_numbers=("NCHW", "OIHW", "NCHW"))
    y = y + b.reshape(1, -1, 1, 1)
    N, C, H, W = y.shape
    y = y.reshape(N, shape, scale, scale, H, W)
    y = jnp.transpose(y, (0, 1, 4, 2, 5, 3))
    return y.reshape(N, shape, H * scale, W * scale)


if __name__ == "__main__":
    # Module config: shape (channels)=4, scale=2, kernel_size=3, edsr, bn=False, act=False
    shape, scale, ksz = 4, 2, 3
    N, H, W = 2, 16, 16
    cout = shape * scale * scale

    key = jax.random.PRNGKey(0)
    kx_, kw_, kb_ = jax.random.split(key, 3)
    x = jax.random.normal(kx_, (N, shape, H, W), dtype=jnp.float32)
    params = {
        "w": jax.random.normal(kw_, (cout, shape, ksz, ksz), dtype=jnp.float32) * 0.1,
        "b": jax.random.normal(kb_, (cout,), dtype=jnp.float32) * 0.1,
    }

    # bn=False, act=False (module defaults)
    out = upsample_forward(x, params, shape=shape, scale=scale, bn=False, act=False)
    out = jax.block_until_ready(out)
    ref = jax.block_until_ready(_reference_forward(x, params, shape=shape, scale=scale))
    assert out.shape == (N, shape, H * scale, W * scale), out.shape
    assert jnp.max(jnp.abs(out - ref)) < 1e-4, float(jnp.max(jnp.abs(out - ref)))

    # also exercise the fused-ReLU path (act=True, bn=False)
    out_act = jax.block_until_ready(
        upsample_forward(x, params, shape=shape, scale=scale, bn=False, act=True))
    ref_act = jnp.maximum(ref, 0.0)
    assert jnp.max(jnp.abs(out_act - ref_act)) < 1e-4, float(jnp.max(jnp.abs(out_act - ref_act)))

    print("KERNEL_OK")
</pallas_src>

<mosaic_0001>
module attributes {stable_mosaic.version = 11 : i64} {
  func.func @_conv_rows_kernel(%arg0: i32, %arg1: memref<1x16x64xf32, #tpu.memory_space<vmem>>, %arg2: memref<192x256xf32, #tpu.memory_space<vmem>>, %arg3: memref<1x256xf32, #tpu.memory_space<vmem>>, %arg4: memref<1x16x256xf32, #tpu.memory_space<vmem>>) attributes {dimension_semantics = [#tpu.dimension_semantics<parallel>], iteration_bounds = array<i64: 2>, scalar_prefetch = 0 : i64, scratch_operands = 0 : i64, tpu.core_type = #tpu.core_type<tc>, window_params = [{transform_indices = @transform_0, window_bounds = array<i64: 1, 16, 64>}, {pipeline_mode = #tpu.pipeline_mode<synchronous>, transform_indices = @transform_1, window_bounds = array<i64: 192, 256>}, {pipeline_mode = #tpu.pipeline_mode<synchronous>, transform_indices = @transform_2, window_bounds = array<i64: 1, 256>}, {transform_indices = @transform_3, window_bounds = array<i64: 1, 16, 256>}]} {
    %c0 = arith.constant 0 : index
    %c0_0 = arith.constant 0 : index
    %c0_1 = arith.constant 0 : index
    %0 = vector.load %arg1[%c0, %c0_0, %c0_1] : memref<1x16x64xf32, #tpu.memory_space<vmem>>, vector<1x16x64xf32>
    %1 = vector.shape_cast %0 : vector<1x16x64xf32> to vector<16x64xf32>
    %cst = arith.constant 0.000000e+00 : f32
    %2 = vector.broadcast %cst : f32 to vector<1x64xf32>
    %3 = vector.extract_strided_slice %1 {offsets = [0, 0], sizes = [15, 64], strides = [1, 1]} : vector<16x64xf32> to vector<15x64xf32>
    %4 = tpu.concatenate %2, %3 in 0 : vector<1x64xf32>, vector<15x64xf32> -> vector<16x64xf32>
    %cst_2 = arith.constant 0.000000e+00 : f32
    %5 = vector.broadcast %cst_2 : f32 to vector<1x64xf32>
    %6 = vector.extract_strided_slice %1 {offsets = [1, 0], sizes = [15, 64], strides = [1, 1]} : vector<16x64xf32> to vector<15x64xf32>
    %7 = tpu.concatenate %6, %5 in 0 : vector<15x64xf32>, vector<1x64xf32> -> vector<16x64xf32>
    %8 = tpu.concatenate %4, %1, %7 in 1 : vector<16x64xf32>, vector<16x64xf32>, vector<16x64xf32> -> vector<16x192xf32>
    %c0_3 = arith.constant 0 : index
    %c0_4 = arith.constant 0 : index
    %9 = vector.load %arg2[%c0_3, %c0_4] : memref<192x256xf32, #tpu.memory_space<vmem>>, vector<192x256xf32>
    %cst_5 = arith.constant dense<0.000000e+00> : vector<16x256xf32>
    %10 = tpu.matmul %8, %9, %cst_5 {dimension_numbers = #tpu.dot_dimension_numbers<[1], [0], [0], [1], [0, 0, 1, 1], [], []>} : vector<16x192xf32>, vector<192x256xf32>, vector<16x256xf32> -> vector<16x256xf32>
    %c0_6 = arith.constant 0 : index
    %c0_7 = arith.constant 0 : index
    %11 = vector.load %arg3[%c0_6, %c0_7] : memref<1x256xf32, #tpu.memory_space<vmem>>, vector<1x256xf32>
    %12 = vector.broadcast %11 : vector<1x256xf32> to vector<16x256xf32>
    %13 = arith.addf %10, %12 : vector<16x256xf32>
    %c0_8 = arith.constant 0 : index
    %c0_9 = arith.constant 0 : index
    %c0_10 = arith.constant 0 : index
    %14 = vector.load %arg4[%c0_8, %c0_9, %c0_10] : memref<1x16x256xf32, #tpu.memory_space<vmem>>, vector<1x16x256xf32>
    %15 = vector.shape_cast %14 : vector<1x16x256xf32> to vector<16x256xf32>
    %16 = vector.shape_cast %13 : vector<16x256xf32> to vector<1x16x256xf32>
    tpu.vector_store %arg4[%c0_8, %c0_9, %c0_10], %16 {strides = array<i32>} : memref<1x16x256xf32, #tpu.memory_space<vmem>>, vector<1x16x256xf32>,
    return
  }
  func.func @transform_0(%arg0: i32) -> (i32, i32, i32) {
    %c0_i32 = arith.constant 0 : i32
    %c0_i32_0 = arith.constant 0 : i32
    %c0_i32_1 = arith.constant 0 : i32
    return %arg0, %c0_i32, %c0_i32_0 : i32, i32, i32
  }
  func.func @transform_1(%arg0: i32) -> (i32, i32) {
    %c0_i32 = arith.constant 0 : i32
    %c0_i32_0 = arith.constant 0 : i32
    %c0_i32_1 = arith.constant 0 : i32
    return %c0_i32, %c0_i32_0 : i32, i32
  }
  func.func @transform_2(%arg0: i32) -> (i32, i32) {
    %c0_i32 = arith.constant 0 : i32
    %c0_i32_0 = arith.constant 0 : i32
    %c0_i32_1 = arith.constant 0 : i32
    return %c0_i32, %c0_i32_0 : i32, i32
  }
  func.func @transform_3(%arg0: i32) -> (i32, i32, i32) {
    %c0_i32 = arith.constant 0 : i32
    %c0_i32_0 = arith.constant 0 : i32
    %c0_i32_1 = arith.constant 0 : i32
    return %arg0, %c0_i32, %c0_i32_0 : i32, i32, i32
  }
}

</mosaic_0001>

<llo_original>
// kernel: tpu_custom_call.1
$region0: #{tpu_custom_call.1}
  #allocation0 [shape = 'u32[]', space=smem, size = 0x4, offset = 0x4, fixed_abs, tag = 'smem constant byte address 0x4 - core index']
  #allocation1 [shape = 'u32[144,128]{1,0:T(1,128)}', space=vmem, size = 0x12000, scoped, tag = 'internal scratch']
  %s0 = inlined_call_operand.hbm [shape: f32[2,16,64], index: 0, kind: input, shape index: {}]
  %s1 = inlined_call_operand.hbm [shape: f32[192,256], index: 1, kind: input, shape index: {}]
  %s2 = inlined_call_operand.vmem [shape: f32[1,256], index: 2, kind: input, shape index: {}]
  %s3 = inlined_call_operand.hbm [shape: f32[2,16,256], index: 3, kind: output, shape index: {}]
  %s4 = sld [smem:[#allocation0]]
  $region53: #{tpu_custom_call.1} parent=0
    _
  %s6 = ssub.s32 1, %s4
  %s7 = scalar_select 0, %s6, %s4
  $region1: #{tpu_custom_call.1} parent=0
    #allocation2 [shape = 'u8[16384]{0}', space=vmem, size = 0x4000, scoped, tag = 'input window, operand 0']
    #allocation3 [shape = 's32[2]{0}', space=sflag, size = 0x8, scoped, tag = 'scoped memory for tpu_custom_call.1']
    #allocation4 [shape = 's32[2]{0}', space=sflag, size = 0x8, scoped, tag = 'scoped memory for tpu_custom_call.1']
    #allocation5 [shape = 'u8[196608]{0}', space=vmem, size = 0x30000, scoped, tag = 'input window, operand 1, single buffered']
    #allocation6 [shape = 's32[1]{0}', space=sflag, size = 0x4, scoped, tag = 'scoped memory for tpu_custom_call.1']
    #allocation7 [shape = 'u8[32768]{0}', space=vmem, size = 0x8000, scoped, tag = 'output window, operand 0']
    %8 = vsyncpa [#allocation3], 0
    %s9 = scalar_lea.sflag [#allocation3], 1
    %10 = vsyncpa %s9, 0
    %11 = vsyncpa [#allocation6], 0
    %12 = vsyncpa [#allocation4], 0
    %s13 = scalar_lea.sflag [#allocation4], 1
    %14 = vsyncpa %s13, 0
    loop: start=0, step=1, limit=4
    $region2: #{tpu_custom_call.1} parent=1 // loop_pre_header
      _
    $region3: #{tpu_custom_call.1} parent=1 // loop_header
      %s16 = sphi 0, %s20
      %p17 = scmp.ge.s32.totalorder %s16, 4
      %s26 = sphi 0, %s28
      %s29 = sphi 0, %s26
      %s30 = sphi 0, %s29
      %s46 = sphi 0, %s30
      %s50 = sphi 0, %s50
      %s52 = sphi 0, %s50
      %s53 = sphi 0, %s52
      %s67 = sphi 0, %s53
      %s71 = sphi 0, %s71
      %s73 = sphi 0, %s71
      %s74 = sphi 0, %s73
      %s88 = sphi 0, %s74
      %s94 = sphi 0, %s96
      %s97 = sphi 0, %s94
      %s98 = sphi 0, %s97
      %s114 = sphi 0, %s98
    $region4: #{tpu_custom_call.1} parent=1 // loop_header_branch
      %19 = sbr.rel (%p17) target = $region8
    $region5: #{tpu_custom_call.1} parent=1 // loop_body
      %s21 = ssub.s32 %s16, 1
      %s22 = ssub.s32 %s16, 2
      %s23 = sadd.s32 %s16, 1
      %s24 = ssub.s32 %s16, %s23
      %p25 = scmp.eq.s32.totalorder %s24, 0
      %s27 = sadd.s32 %s26, 1
      %s28 = scalar_select %p25, %s26, %s27
      %p31 = pneg %p25
      %p32 = scmp.eq.s32.totalorder %s16, 1
      %p33 = por %p31, %p32
      %p34 = scmp.ne.s32.totalorder %s26, %s29
      %p35 = scmp.eq.s32.totalorder %s16, 0
      %p36 = por %p34, %p35
      %p37 = scmp.ne.s32.totalorder %s26, %s29
      %p38 = scmp.eq.s32.totalorder %s21, 1
      %p39 = por %p37, %p38
      %p40 = scmp.ne.s32.totalorder %s29, %s30
      %p41 = scmp.eq.s32.totalorder %s21, 0
      %p42 = por %p40, %p41
      %p43 = scmp.ne.s32.totalorder %s29, %s30
      %p44 = scmp.eq.s32.totalorder %s22, 1
      %p45 = por %p43, %p44
      %p47 = scmp.ne.s32.totalorder %s30, %s46
      %p48 = scmp.eq.s32.totalorder %s22, 0
      %p49 = por %p47, %p48
      %s51 = sadd.s32 %s50, 1
      %p54 = scmp.eq.s32.totalorder %s16, 1
      %p55 = scmp.ne.s32.totalorder %s50, %s52
      %p56 = scmp.eq.s32.totalorder %s16, 0
      %p57 = por %p55, %p56
      %p58 = scmp.ne.s32.totalorder %s50, %s52
      %p59 = scmp.eq.s32.totalorder %s21, 1
      %p60 = por %p58, %p59
      %p61 = scmp.ne.s32.totalorder %s52, %s53
      %p62 = scmp.eq.s32.totalorder %s21, 0
      %p63 = por %p61, %p62
      %p64 = scmp.ne.s32.totalorder %s52, %s53
      %p65 = scmp.eq.s32.totalorder %s22, 1
      %p66 = por %p64, %p65
      %p68 = scmp.ne.s32.totalorder %s53, %s67
      %p69 = scmp.eq.s32.totalorder %s22, 0
      %p70 = por %p68, %p69
      %s72 = sadd.s32 %s71, 1
      %p75 = scmp.eq.s32.totalorder %s16, 1
      %p76 = scmp.ne.s32.totalorder %s71, %s73
      %p77 = scmp.eq.s32.totalorder %s16, 0
      %p78 = por %p76, %p77
      %p79 = scmp.ne.s32.totalorder %s71, %s73
      %p80 = scmp.eq.s32.totalorder %s21, 1
      %p81 = por %p79, %p80
      %p82 = scmp.ne.s32.totalorder %s73, %s74
      %p83 = scmp.eq.s32.totalorder %s21, 0
      %p84 = por %p82, %p83
      %p85 = scmp.ne.s32.totalorder %s73, %s74
      %p86 = scmp.eq.s32.totalorder %s22, 1
      %p87 = por %p85, %p86
      %p89 = scmp.ne.s32.totalorder %s74, %s88
      %p90 = scmp.eq.s32.totalorder %s22, 0
      %p91 = por %p89, %p90
      %s92 = ssub.s32 %s16, %s23
      %p93 = scmp.eq.s32.totalorder %s92, 0
      %s95 = sadd.s32 %s94, 1
      %s96 = scalar_select %p93, %s94, %s95
      %p99 = pneg %p93
      %p100 = scmp.eq.s32.totalorder %s16, 1
      %p101 = por %p99, %p100
      %p102 = scmp.ne.s32.totalorder %s94, %s97
      %p103 = scmp.eq.s32.totalorder %s16, 0
      %p104 = por %p102, %p103
      %p105 = scmp.ne.s32.totalorder %s94, %s97
      %p106 = scmp.eq.s32.totalorder %s21, 1
      %p107 = por %p105, %p106
      %p108 = scmp.ne.s32.totalorder %s97, %s98
      %p109 = scmp.eq.s32.totalorder %s21, 0
      %p110 = por %p108, %p109
      %p111 = scmp.ne.s32.totalorder %s97, %s98
      %p112 = scmp.eq.s32.totalorder %s22, 1
      %p113 = por %p111, %p112
      %p115 = scmp.ne.s32.totalorder %s98, %s114
      %p116 = scmp.eq.s32.totalorder %s22, 0
      %p117 = por %p115, %p116
      %p118 = scmp.le.s32.totalorder 1, %s16
      %p119 = scmp.lt.s32.totalorder %s16, 3
      %p120 = pnand %p118, %p119
      %p121 = pneg %p120
      // Predicated region
      $region9: #{tpu_custom_call.1} parent=5 // pred_check
        _
      $region10: #{tpu_custom_call.1} parent=5 // pred_check_branch
        %123 = sbr.rel (%p120) target = $region12
      $region11: #{tpu_custom_call.1} parent=5 // pred_region
        %s124 = ssub.s32 %s16, 1
        // Predicated region
        $region13: #{tpu_custom_call.1} parent=11 // pred_check
          %p125 = pneg %p63
        $region14: #{tpu_custom_call.1} parent=11 // pred_check_branch
          %127 = sbr.rel (%p125) target = $region16
        $region15: #{tpu_custom_call.1} parent=11 // pred_region
          %s129 = ssub.s32 6144, 6144
          %130 = vsyncadd [#allocation6], %s129
          %s131 = sshll.u32 [#allocation5], 4
          %s132 = int_to_ptr.vmem [resolvable:$true] %s131
          %137 = dma.hbm_to_vmem [thread:$0]  %s1, 6144, %s132, [#allocation6], 256, 256, 16
        $region16: #{tpu_custom_call.1} parent=11 // pred_fallthru
          _
        // Predicated region
        $region17: #{tpu_custom_call.1} parent=11 // pred_check
          %p138 = pneg %p84
        $region18: #{tpu_custom_call.1} parent=11 // pred_check_branch
          %140 = sbr.rel (%p138) target = $region20
        $region19: #{tpu_custom_call.1} parent=11 // pred_region
          _
        $region20: #{tpu_custom_call.1} parent=11 // pred_fallthru
          _
      $region12: #{tpu_custom_call.1} parent=5 // pred_fallthru
        _
      %p141 = scmp.lt.s32.totalorder %s16, 2
      // Predicated region
      $region21: #{tpu_custom_call.1} parent=5 // pred_check
        %p142 = pneg %p141
      $region22: #{tpu_custom_call.1} parent=5 // pred_check_branch
        %144 = sbr.rel (%p142) target = $region24
      $region23: #{tpu_custom_call.1} parent=5 // pred_region
        // Predicated region
        $region25: #{tpu_custom_call.1} parent=23 // pred_check
          %p145 = pneg %p36
        $region26: #{tpu_custom_call.1} parent=23 // pred_check_branch
          %147 = sbr.rel (%p145) target = $region28
        $region27: #{tpu_custom_call.1} parent=23 // pred_region
          %s148 = sand.u32 %s26, 1
          %s149 = scalar_lea.sflag [#allocation3], %s148
          %s150 = sand.u32 %s26, 1
          %s151 = smul.addr %s150, 16
          %s152 = scalar_lea.vmem [#allocation2], %s151
          %s154 = ssub.s32 256, 256
          %155 = vsyncadd %s149, %s154
          %s156 = smul.addr %s16, 2
          %s157 = smul.addr %s156, 128
          %s158 = scalar_lea.hbm %s0, %s157
          %s159 = sshll.u32 %s152, 4
          %s160 = int_to_ptr.vmem [resolvable:$true] %s159
          %165 = dma.hbm_to_vmem [thread:$0]  %s158, 256, %s160, %s149, 128, 128, 8
        $region28: #{tpu_custom_call.1} parent=23 // pred_fallthru
          _
      $region24: #{tpu_custom_call.1} parent=5 // pred_fallthru
        _
      %p166 = scmp.le.s32.totalorder 1, %s16
      %p167 = scmp.lt.s32.totalorder %s16, 3
      %p168 = pnand %p166, %p167
      %p169 = pneg %p168
      // Predicated region
      $region29: #{tpu_custom_call.1} parent=5 // pred_check
        _
      $region30: #{tpu_custom_call.1} parent=5 // pred_check_branch
        %171 = sbr.rel (%p168) target = $region32
      $region31: #{tpu_custom_call.1} parent=5 // pred_region
        %s172 = ssub.s32 %s16, 1
        %s173 = sand.u32 %s29, 1
        %s174 = scalar_lea.sflag [#allocation3], %s173
        %s175 = sand.u32 %s29, 1
        %s176 = smul.addr %s175, 16
        %s177 = scalar_lea.vmem [#allocation2], %s176
        // Predicated region
        $region33: #{tpu_custom_call.1} parent=31 // pred_check
          %p178 = pneg %p42
        $region34: #{tpu_custom_call.1} parent=31 // pred_check_branch
          %180 = sbr.rel (%p178) target = $region36
        $region35: #{tpu_custom_call.1} parent=31 // pred_region
          %181 = dma.done %s174, 256
        $region36: #{tpu_custom_call.1} parent=31 // pred_fallthru
          _
        // Predicated region
        $region37: #{tpu_custom_call.1} parent=31 // pred_check
          %p182 = pneg %p63
        $region38: #{tpu_custom_call.1} parent=31 // pred_check_branch
          %184 = sbr.rel (%p182) target = $region40
        $region39: #{tpu_custom_call.1} parent=31 // pred_region
          %185 = dma.done [#allocation6], 6144
        $region40: #{tpu_custom_call.1} parent=31 // pred_fallthru
          _
        %s186 = sand.u32 %s29, 1
        %s187 = scalar_lea.sflag [#allocation3], %s186
        %s188 = sand.u32 %s29, 1
        %s189 = smul.addr %s188, 16
        %s190 = scalar_lea.vmem [#allocation2], %s189
        %p191 = pneg %p42
        %p192 = pneg %p39
        %p193 = pneg %p63
        %p194 = pneg %p60
        %p195 = pneg %p84
        %p196 = pneg %p81
        %p197 = pneg %p110
        %p198 = pneg %p107
        %s199 = sand.u32 %s97, 1
        %s200 = scalar_lea.sflag [#allocation4], %s199
        %s201 = sand.u32 %s97, 1
        %s202 = smul.addr %s201, 32
        %s203 = scalar_lea.vmem [#allocation7], %s202
        %v204 = vld [vmem:[%s177] sm:$0xff]
        %v205 = vld [vmem:[%s177 + $0x8] sm:$0xff]
        %vm208 = vcmask 1040384
        %v209 = vrot.slane %v204, 7
        %v210 = vrot.slane %v205, 7
        %v211 = vsel %vm208, %v209, %v210
        %v214 = vsel %vm208, 0.0, %v209
        %vm215 = vcmask 1046528
        %v216 = vrot.slane %v204, 1
        %v217 = vrot.slane %v205, 1
        %v218 = vsel %vm215, %v216, %v217
        %v220 = vsel %vm215, %v217, 0.0
        %221 = vrot.lane.b32.xlu0 %v204, 64
        %v222 = vpop.permute.xlu0 %221
        %223 = vrot.lane.b32.xlu0 %v205, 64
        %v224 = vpop.permute.xlu0 %223
        %vm227 = vcmask 523264
        %v228 = vsel %vm227, %v214, %v222
        %v229 = vsel %vm227, %v211, %v224
        %v230 = vld [vmem:[#allocation5] sm:$0xff]
        %v231 = vld [vmem:[#allocation5 + $0x8] sm:$0xff]
        %v232 = vld [vmem:[#allocation5 + $0x10] sm:$0xff]
        %v233 = vld [vmem:[#allocation5 + $0x18] sm:$0xff]
        %v234 = vld [vmem:[#allocation5 + $0x20] sm:$0xff]
        %v235 = vld [vmem:[#allocation5 + $0x28] sm:$0xff]
        %v236 = vld [vmem:[#allocation5 + $0x30] sm:$0xff]
        %v237 = vld [vmem:[#allocation5 + $0x38] sm:$0xff]
        %v238 = vld [vmem:[#allocation5 + $0x40] sm:$0xff]
        %v239 = vld [vmem:[#allocation5 + $0x48] sm:$0xff]
        %v240 = vld [vmem:[#allocation5 + $0x50] sm:$0xff]
        %v241 = vld [vmem:[#allocation5 + $0x58] sm:$0xff]
        %v242 = vld [vmem:[#allocation5 + $0x60] sm:$0xff]
        %v243 = vld [vmem:[#allocation5 + $0x68] sm:$0xff]
        %v244 = vld [vmem:[#allocation5 + $0x70] sm:$0xff]
        %v245 = vld [vmem:[#allocation5 + $0x78] sm:$0xff]
        %v246 = vld [vmem:[#allocation5 + $0x80] sm:$0xff]
        %v247 = vld [vmem:[#allocation5 + $0x88] sm:$0xff]
        %v248 = vld [vmem:[#allocation5 + $0x90] sm:$0xff]
        %v249 = vld [vmem:[#allocation5 + $0x98] sm:$0xff]
        %v250 = vld [vmem:[#allocation5 + $0xa0] sm:$0xff]
        %v251 = vld [vmem:[#allocation5 + $0xa8] sm:$0xff]
        %v252 = vld [vmem:[#allocation5 + $0xb0] sm:$0xff]
        %v253 = vld [vmem:[#allocation5 + $0xb8] sm:$0xff]
        %v254 = vld [vmem:[#allocation5 + $0xc0] sm:$0xff]
        %v255 = vld [vmem:[#allocation5 + $0xc8] sm:$0xff]
        %v256 = vld [vmem:[#allocation5 + $0xd0] sm:$0xff]
        %v257 = vld [vmem:[#allocation5 + $0xd8] sm:$0xff]
        %v258 = vld [vmem:[#allocation5 + $0xe0] sm:$0xff]
        %v259 = vld [vmem:[#allocation5 + $0xe8] sm:$0xff]
        %v260 = vld [vmem:[#allocation5 + $0xf0] sm:$0xff]
        %v261 = vld [vmem:[#allocation5 + $0xf8] sm:$0xff]
        %v262 = vld [vmem:[#allocation5 + $0x100] sm:$0xff]
        %v263 = vld [vmem:[#allocation5 + $0x108] sm:$0xff]
        %v264 = vld [vmem:[#allocation5 + $0x110] sm:$0xff]
        %v265 = vld [vmem:[#allocation5 + $0x118] sm:$0xff]
        %v266 = vld [vmem:[#allocation5 + $0x120] sm:$0xff]
        %v267 = vld [vmem:[#allocation5 + $0x128] sm:$0xff]
        %v268 = vld [vmem:[#allocation5 + $0x130] sm:$0xff]
        %v269 = vld [vmem:[#allocation5 + $0x138] sm:$0xff]
        %v270 = vld [vmem:[#allocation5 + $0x140] sm:$0xff]
        %v271 = vld [vmem:[#allocation5 + $0x148] sm:$0xff]
        %v272 = vld [vmem:[#allocation5 + $0x150] sm:$0xff]
        %v273 = vld [vmem:[#allocation5 + $0x158] sm:$0xff]
        %v274 = vld [vmem:[#allocation5 + $0x160] sm:$0xff]
        %v275 = vld [vmem:[#allocation5 + $0x168] sm:$0xff]
        %v276 = vld [vmem:[#allocation5 + $0x170] sm:$0xff]
        %v277 = vld [vmem:[#allocation5 + $0x178] sm:$0xff]
        %v278 = vld [vmem:[%s2] sm:$0x3]
        %v280 = vlaneseq
        %v281 = vshrl.u32 %v280, 7
        %v282 = vsub.s32 0, %v281
        %v283 = vrot.slane %v278, %v282
        %v284 = vlaneseq
        %v285 = vshrl.u32 %v284, 7
        %v286 = vsub.s32 1, %v285
        %v287 = vrot.slane %v278, %v286
        %v290 = vsel %vm227, %v218, 0
        %v293 = vsel %vm227, %v220, 0
        %295 = vmatprep.subr.mxu0 %v231
        %296 = vmatpush1.msra.mxu0 %v230
        %297 = vmatprep.subr.mxu0 %v233
        %298 = vmatpush1.msra.mxu0 %v232
        %299 = vmatprep.subr.mxu0 %v235
        %300 = vmatpush1.msra.mxu0 %v234
        %301 = vmatprep.subr.mxu0 %v237
        %302 = vmatpush1.msra.mxu0 %v236
        %303 = vmatprep.subr.mxu0 %v239
        %304 = vmatpush1.msra.mxu0 %v238
        %305 = vmatprep.subr.mxu0 %v241
        %306 = vmatpush1.msra.mxu0 %v240
        %307 = vmatprep.subr.mxu0 %v243
        %308 = vmatpush1.msra.mxu0 %v242
        %309 = vmatprep.subr.mxu0 %v245
        %310 = vmatpush1.msra.mxu0 %v244
        %311 = vmatprep.subr.mxu0 %v247
        %312 = vmatpush1.msra.mxu0 %v246
        %313 = vmatprep.subr.mxu0 %v249
        %314 = vmatpush1.msra.mxu0 %v248
        %315 = vmatprep.subr.mxu0 %v251
        %316 = vmatpush1.msra.mxu0 %v250
        %317 = vmatprep.subr.mxu0 %v253
        %318 = vmatpush1.msra.mxu0 %v252
        %319 = vmatprep.subr.mxu0 %v255
        %320 = vmatpush1.msra.mxu0 %v254
        %321 = vmatprep.subr.mxu0 %v257
        %322 = vmatpush1.msra.mxu0 %v256
        %323 = vmatprep.subr.mxu0 %v259
        %324 = vmatpush1.msra.mxu0 %v258
        %325 = vmatprep.subr.mxu0 %v261
        %326 = vmatpush1.msra.mxu0 %v260
        %327 = vmatprep.subr.mxu0 %v263
        %328 = vmatpush1.msra.mxu0 %v262
        %329 = vmatprep.subr.mxu0 %v265
        %330 = vmatpush1.msra.mxu0 %v264
        %331 = vmatprep.subr.mxu0 %v267
        %332 = vmatpush1.msra.mxu0 %v266
        %333 = vmatprep.subr.mxu0 %v269
        %334 = vmatpush1.msra.mxu0 %v268
        %335 = vmatprep.subr.mxu0 %v271
        %336 = vmatpush1.msra.mxu0 %v270
        %337 = vmatprep.subr.mxu0 %v273
        %338 = vmatpush1.msra.mxu0 %v272
        %339 = vmatprep.subr.mxu0 %v275
        %340 = vmatpush1.msra.mxu0 %v274
        %341 = vmatprep.subr.mxu0 %v277
        %342 = vmatpush1.msra.mxu0 %v276
        %343 = vmatprep.subr.mxu0 0.0
        %344 = vmatpush1.msra.mxu0 0.0
        %345 = vmatprep.subr.mxu0 0.0
        %346 = vmatpush1.msra.mxu0 0.0
        %347 = vmatprep.subr.mxu0 0.0
        %348 = vmatpush1.msra.mxu0 0.0
        %349 = vmatprep.subr.mxu0 0.0
        %350 = vmatpush1.msra.mxu0 0.0
        %351 = vmatprep.subr.mxu0 0.0
        %352 = vmatpush1.msra.mxu0 0.0
        %353 = vmatprep.subr.mxu0 0.0
        %354 = vmatpush1.msra.mxu0 0.0
        %355 = vmatprep.subr.mxu0 0.0
        %356 = vmatpush1.msra.mxu0 0.0
        %357 = vmatprep.subr.mxu0 0.0
        %358 = vmatpush1.msra.mxu0 0.0
        %359 = vmatprep.mubr.f32.mxu0 %v290
        %360 = vmatmul.mubr.f32.gmra.mrb[0].mxu0 %v228
        %v361 = vpop.f32.mrb[0].mxu0
        %v362 = vadd.f32 %v283, %v361
        %v363 = vpop.f32.mrb[0].mxu0
        %v364 = vadd.f32 %v287, %v363
        %365 = vmatprep.mubr.f32.mxu0 %v293
        %366 = vmatmul.mubr.f32.gmra.mrb[0].mxu0 %v229
        %v367 = vpop.f32.mrb[0].mxu0
        %v368 = vadd.f32 %v283, %v367
        %v369 = vpop.f32.mrb[0].mxu0
        %v370 = vadd.f32 %v287, %v369
        %371 = vdwg.mxu0
        %372 = vst [vmem:[%s203] sm:$0xff] %v362
        %373 = vst [vmem:[%s203 + $0x8] sm:$0xff] %v364
        %374 = vst [vmem:[%s203 + $0x10] sm:$0xff] %v368
        %375 = vst [vmem:[%s203 + $0x18] sm:$0xff] %v370
        %s376 = sand.u32 %s97, 1
        %s377 = scalar_lea.sflag [#allocation4], %s376
        %s378 = sand.u32 %s97, 1
        %s379 = smul.addr %s378, 32
        %s380 = scalar_lea.vmem [#allocation7], %s379
        // Predicated region
        $region41: #{tpu_custom_call.1} parent=31 // pred_check
          %p381 = pneg %p107
        $region42: #{tpu_custom_call.1} parent=31 // pred_check_branch
          %383 = sbr.rel (%p381) target = $region44
        $region43: #{tpu_custom_call.1} parent=31 // pred_region
          %s385 = ssub.s32 512, 512
          %386 = vsyncadd %s377, %s385
          %s387 = smul.addr %s21, 4
          %s388 = smul.addr %s387, 128
          %s389 = scalar_lea.hbm %s3, %s388
          %s390 = sshll.u32 %s380, 4
          %s391 = int_to_ptr.vmem [resolvable:$true] %s390
          %396 = dma.vmem_to_hbm [thread:$0]  %s391, 512, %s389, %s377, 256, 256, 16
        $region44: #{tpu_custom_call.1} parent=31 // pred_fallthru
          _
      $region32: #{tpu_custom_call.1} parent=5 // pred_fallthru
        _
      %p397 = scmp.le.s32.totalorder 2, %s16
      // Predicated region
      $region45: #{tpu_custom_call.1} parent=5 // pred_check
        %p398 = pneg %p397
      $region46: #{tpu_custom_call.1} parent=5 // pred_check_branch
        %400 = sbr.rel (%p398) target = $region48
      $region47: #{tpu_custom_call.1} parent=5 // pred_region
        %s401 = ssub.s32 %s16, 2
        // Predicated region
        $region49: #{tpu_custom_call.1} parent=47 // pred_check
          %p402 = pneg %p113
        $region50: #{tpu_custom_call.1} parent=47 // pred_check_branch
          %404 = sbr.rel (%p402) target = $region52
        $region51: #{tpu_custom_call.1} parent=47 // pred_region
          %s405 = sand.u32 %s98, 1
          %s406 = scalar_lea.sflag [#allocation4], %s405
          %s407 = sand.u32 %s98, 1
          %s408 = smul.addr %s407, 32
          %s409 = scalar_lea.vmem [#allocation7], %s408
          %410 = dma.done %s406, 512
        $region52: #{tpu_custom_call.1} parent=47 // pred_fallthru
          _
      $region48: #{tpu_custom_call.1} parent=5 // pred_fallthru
        _
    $region6: #{tpu_custom_call.1} parent=1 // loop_footer
      %s20 = sadd.s32 1, %s16
    $region7: #{tpu_custom_call.1} parent=1 // loop_footer_branch
      %15 = sbr.rel target = $region3
    $region8: #{tpu_custom_call.1} parent=1 // loop_exit
      _
    %411 = vsyncpa [#allocation3], 1
    %s412 = scalar_lea.sflag [#allocation3], 1
    %413 = vsyncpa %s412, 1
    %414 = vsyncpa [#allocation6], 1
    %415 = vsyncpa [#allocation4], 1
    %s416 = scalar_lea.sflag [#allocation4], 1
    %417 = vsyncpa %s416, 1

</llo_original>
